<compile_context>
chip_gen: v6e
topology: v6e:2x2x1
jax: 0.10.0
libtpu: 0.0.40
codegen_flags: <defaults>
</compile_context>

<pallas_src>
import functools

import jax
import jax.numpy as jnp
from jax.experimental import pallas as pl
from jax.experimental.pallas import tpu as pltpu

_DEFAULT_SCOPED_VMEM = 32 * 1024 * 1024  # default scoped-VMEM limit (v6e/v7x)


def _round_up(n, m):
    return ((n + m - 1) // m) * m


def _pad2d(a, rows, cols):
    return jnp.pad(a, ((0, rows - a.shape[0]), (0, cols - a.shape[1])))


def _vmem_bytes(*shapes):
    """Rough f32 VMEM footprint of the given shapes (lane/sublane padded)."""
    total = 0
    for s in shapes:
        rows = _round_up(s[-2], 8) if len(s) >= 2 else 1
        cols = _round_up(s[-1], 128)
        lead = 1
        for d in s[:-2]:
            lead *= d
        total += 4 * lead * rows * cols
    return total


def _compiler_params(sem, est_bytes):
    # Only raise the scoped-VMEM limit when the estimate exceeds the default
    # (keeps us safe on v7x's 64 MiB physical VMEM for small problems).
    limit = None
    if est_bytes > _DEFAULT_SCOPED_VMEM:
        limit = int(est_bytes * 5 // 4)  # 25% headroom
    return pltpu.CompilerParams(dimension_semantics=sem, vmem_limit_bytes=limit)


# ----------------------------------------------------------------------------
# M-tiled, pipelined linear: out = (tanh(x) if tanh_input else x) @ W + b.
# Weight/bias resident (constant index_map, one DMA); rows streamed TILE_M at
# a time with double buffering; M tiles are independent -> "parallel".
# ----------------------------------------------------------------------------
def _linear_kernel(x_ref, w_ref, b_ref, o_ref, *, tanh_input):
    x = x_ref[...]
    if tanh_input:
        x = jnp.tanh(x)
    o_ref[...] = (jnp.dot(x, w_ref[...], preferred_element_type=jnp.float32)
                  + b_ref[...]).astype(o_ref.dtype)


def _linear(x, w, b, *, tanh_input=False, tile_m=512):
    M, K = x.shape
    N = w.shape[1]
    tile_m = min(tile_m, _round_up(M, 8))
    Mp = _round_up(M, tile_m)
    if Mp != M:
        x = jnp.pad(x, ((0, Mp - M), (0, 0)))

    est = 2 * _vmem_bytes((tile_m, K), (K, N), (1, N), (tile_m, N))
    out = pl.pallas_call(
        functools.partial(_linear_kernel, tanh_input=tanh_input),
        out_shape=jax.ShapeDtypeStruct((Mp, N), jnp.float32),
        grid_spec=pltpu.PrefetchScalarGridSpec(
            num_scalar_prefetch=0,
            grid=(Mp // tile_m,),
            in_specs=[
                pl.BlockSpec((tile_m, K), lambda i: (i, 0)),   # streamed rows
                pl.BlockSpec((K, N), lambda i: (0, 0)),        # resident weight
                pl.BlockSpec((1, N), lambda i: (0, 0)),        # resident bias
            ],
            out_specs=pl.BlockSpec((tile_m, N), lambda i: (i, 0)),
        ),
        compiler_params=_compiler_params(("parallel",), est),
        cost_estimate=pl.CostEstimate(
            flops=2 * Mp * K * N,
            transcendentals=Mp * K if tanh_input else 0,
            bytes_accessed=4 * (Mp * K + K * N + N + Mp * N),
        ),
    )(x, w, b)
    return out[:M]


# ----------------------------------------------------------------------------
# Fused recurrence over a chunk of timesteps per grid step:
#   h_{t+1} = c*h_t + d*( tanh(h_t) @ w_hh + x_t @ w_ih + (b_ih + b_hh) )
# h is carried in vregs across the unrolled chunk and in a VMEM scratch across
# grid steps; w_ih / w_hh / bias are resident (constant index_map, 1 DMA).
# ----------------------------------------------------------------------------
def _recurrence_kernel(h0_ref, x_ref, w_ih_ref, w_hh_ref, b_ref, h_all_ref,
                       h_scr, *, c, d, chunk):
    @pl.when(pl.program_id(0) == 0)
    def _():
        h_scr[...] = h0_ref[...]

    def step(t, h):
        # i2h fused into the step: u_t = x_t @ w_ih + (b_ih + b_hh)
        u = (jnp.dot(x_ref[t], w_ih_ref[...],
                     preferred_element_type=jnp.float32) + b_ref[...])
        rec = jnp.dot(jnp.tanh(h), w_hh_ref[...],
                      preferred_element_type=jnp.float32)
        h_new = c * h + d * (rec + u)
        h_all_ref[t] = h_new
        return h_new

    h_scr[...] = jax.lax.fori_loop(0, chunk, step, h_scr[...], unroll=True)


def ctl_rnn_sequence(h0, xs, params, tau=10, chunk=32):
    """Run the CtlRNN forward for T steps.

    h0: (B, H) f32, xs: (T, B, I) f32.
    Returns (h_all, o_all) with shapes (T, B, H) and (T, B, O):
    h_all[t], o_all[t] are exactly the outputs of the module's forward applied
    sequentially t+1 times.
    """
    c = 1.0 - 1.0 / tau
    d = 1.0 - c
    w_ih, b_ih, w_hh, b_hh, w_ho, b_ho = params

    T, B, I = xs.shape
    H = h0.shape[1]
    O = w_ho.shape[1]

    # Pad to vreg / MXU friendly shapes (zeros keep the math exact).
    Bp = _round_up(B, 8)
    Hp = _round_up(H, 128)
    Op = _round_up(O, 128)
    chunk = max(1, min(chunk, T))
    Tp = _round_up(T, chunk)

    w_ih_p = _pad2d(w_ih, I, Hp)              # input width left unpadded
    w_hh_p = _pad2d(w_hh, Hp, Hp)
    w_ho_p = _pad2d(w_ho, Hp, Op)
    b_comb_p = _pad2d(b_ih + b_hh, 1, Hp)     # fold both biases into one
    b_ho_p = _pad2d(b_ho, 1, Op)

    h0_p = _pad2d(h0, Bp, Hp)
    xs_p = jnp.pad(xs, ((0, Tp - T), (0, Bp - B), (0, 0)))

    # --- Recurrence: one pallas_call, grid over time chunks ------------------
    est_rec = (2 * _vmem_bytes((Bp, Hp), (chunk, Bp, I), (I, Hp), (Hp, Hp),
                               (1, Hp), (chunk, Bp, Hp))
               + _vmem_bytes((Bp, Hp)))
    cost = pl.CostEstimate(
        flops=2 * Tp * Bp * Hp * Hp + 2 * Tp * Bp * I * Hp + 6 * Tp * Bp * Hp,
        transcendentals=Tp * Bp * Hp,
        bytes_accessed=4 * (w_hh_p.size + w_ih_p.size + xs_p.size
                            + Tp * Bp * Hp + h0_p.size + Hp),
    )
    # TODO(synk): for Hp >~ 2K on v7x (64 MiB VMEM), K-tile w_hh over an extra
    # "arbitrary" grid axis (accumulate into a scratch) instead of keeping the
    # full matrix resident; optionally cast weights to bf16 on v6e/v7x.
    # TODO(synk): if profiling shows exposed DMA on the streamed xs chunk, add
    # pipeline_mode=pl.Buffered(3) to its BlockSpec.
    h_all_p = pl.pallas_call(
        functools.partial(_recurrence_kernel, c=c, d=d, chunk=chunk),
        out_shape=jax.ShapeDtypeStruct((Tp, Bp, Hp), jnp.float32),
        grid_spec=pltpu.PrefetchScalarGridSpec(
            num_scalar_prefetch=0,
            grid=(Tp // chunk,),
            in_specs=[
                pl.BlockSpec((Bp, Hp), lambda s: (0, 0)),         # h0 (resident)
                pl.BlockSpec((chunk, Bp, I), lambda s: (s, 0, 0)),  # x chunk
                pl.BlockSpec((I, Hp), lambda s: (0, 0)),          # w_ih (resident)
                pl.BlockSpec((Hp, Hp), lambda s: (0, 0)),         # w_hh (resident)
                pl.BlockSpec((1, Hp), lambda s: (0, 0)),          # bias (resident)
            ],
            out_specs=pl.BlockSpec((chunk, Bp, Hp), lambda s: (s, 0, 0)),
            scratch_shapes=[pltpu.VMEM((Bp, Hp), jnp.float32)],   # carried h
        ),
        compiler_params=_compiler_params(("arbitrary",), est_rec),
        cost_estimate=cost,
    )(h0_p, xs_p, w_ih_p, w_hh_p, b_comb_p)

    # --- Hoisted output projection: o_t = tanh(h_t) @ w_ho + b_ho ------------
    h_real = h_all_p[:T]                                          # (T, Bp, Hp)
    o_all_p = _linear(h_real.reshape(T * Bp, Hp), w_ho_p, b_ho_p,
                      tanh_input=True).reshape(T, Bp, Op)

    return h_all_p[:T, :B, :H], o_all_p[:, :B, :O]


def ctl_rnn_step(h, x, params, tau=10):
    """One CtlRNN step (the PyTorch module's forward). h:(B,H), x:(B,I)."""
    h_all, o_all = ctl_rnn_sequence(h, x[None], params, tau=tau)
    return h_all[0], o_all[0]


# ----------------------------------------------------------------------------
# Parameters + pure-JAX references.
# ----------------------------------------------------------------------------
def init_params(key, n_input, n_hidden, n_target):
    """Deterministic synthetic parameters (PyTorch Linear-like, stored
    transposed as (in, out) for the kernel)."""
    ks = jax.random.split(key, 6)
    scale = 0.1
    w_ih = scale * jax.random.normal(ks[0], (n_input, n_hidden), jnp.float32)
    b_ih = scale * jax.random.normal(ks[1], (1, n_hidden), jnp.float32)
    w_hh = scale * jax.random.normal(ks[2], (n_hidden, n_hidden), jnp.float32)
    b_hh = scale * jax.random.normal(ks[3], (1, n_hidden), jnp.float32)
    w_ho = scale * jax.random.normal(ks[4], (n_hidden, n_target), jnp.float32)
    b_ho = scale * jax.random.normal(ks[5], (1, n_target), jnp.float32)
    return (w_ih, b_ih, w_hh, b_hh, w_ho, b_ho)


def ctl_rnn_ref(h, x, params, tau=10):
    """Single-step pure-JAX reference matching the PyTorch forward."""
    c = 1.0 - 1.0 / tau
    d = 1.0 - c
    w_ih, b_ih, w_hh, b_hh, w_ho, b_ho = params
    h_new = c * h + d * (jnp.tanh(h) @ w_hh + b_hh + x @ w_ih + b_ih)
    o = jnp.tanh(h_new) @ w_ho + b_ho
    return h_new, o


def ctl_rnn_ref_scan(h0, xs, params, tau=10):
    """Multi-step pure-JAX reference (scan of the module forward)."""
    def step(h, x):
        h_new, o = ctl_rnn_ref(h, x, params, tau=tau)
        return h_new, (h_new, o)
    _, (h_all, o_all) = jax.lax.scan(step, h0, xs)
    return h_all, o_all


if __name__ == "__main__":
    B, n_input, n_hidden, n_target, tau, T = 2, 16, 32, 8, 10, 8

    key = jax.random.PRNGKey(0)
    k_h, k_x, k_p = jax.random.split(key, 3)

    h0 = jax.random.normal(k_h, (B, n_hidden), jnp.float32)
    xs = jax.random.normal(k_x, (T, B, n_input), jnp.float32)
    params = init_params(k_p, n_input, n_hidden, n_target)

    # Fused T-step sequence kernel (also exercises chunking with chunk < T).
    h_all, o_all = ctl_rnn_sequence(h0, xs, params, tau=tau, chunk=4)
    jax.block_until_ready((h_all, o_all))

    h_all_ref, o_all_ref = ctl_rnn_ref_scan(h0, xs, params, tau=tau)
    assert jnp.allclose(h_all, h_all_ref, atol=1e-4, rtol=1e-4), "h_all mismatch"
    assert jnp.allclose(o_all, o_all_ref, atol=1e-4, rtol=1e-4), "o_all mismatch"

    # Single-step path (exactly the module's forward).
    h1, o1 = ctl_rnn_step(h0, xs[0], params, tau=tau)
    jax.block_until_ready((h1, o1))
    h1_ref, o1_ref = ctl_rnn_ref(h0, xs[0], params, tau=tau)
    assert jnp.allclose(h1, h1_ref, atol=1e-5, rtol=1e-5), "step h mismatch"
    assert jnp.allclose(o1, o1_ref, atol=1e-5, rtol=1e-5), "step o mismatch"

    print("KERNEL_OK")
</pallas_src>

<mosaic_0001>
module attributes {stable_mosaic.version = 11 : i64} {
  func.func @_recurrence_kernel(%arg0: i32, %arg1: memref<8x128xf32, #tpu.memory_space<vmem>>, %arg2: memref<4x8x16xf32, #tpu.memory_space<vmem>>, %arg3: memref<16x128xf32, #tpu.memory_space<vmem>>, %arg4: memref<128x128xf32, #tpu.memory_space<vmem>>, %arg5: memref<1x128xf32, #tpu.memory_space<vmem>>, %arg6: memref<4x8x128xf32, #tpu.memory_space<vmem>>, %arg7: memref<8x128xf32, #tpu.memory_space<vmem>>) attributes {dimension_semantics = [#tpu.dimension_semantics<arbitrary>], iteration_bounds = array<i64: 2>, scalar_prefetch = 0 : i64, scratch_operands = 1 : i64, tpu.core_type = #tpu.core_type<tc>, window_params = [{pipeline_mode = #tpu.pipeline_mode<synchronous>, transform_indices = @transform_0, window_bounds = array<i64: 8, 128>}, {transform_indices = @transform_1, window_bounds = array<i64: 4, 8, 16>}, {pipeline_mode = #tpu.pipeline_mode<synchronous>, transform_indices = @transform_2, window_bounds = array<i64: 16, 128>}, {pipeline_mode = #tpu.pipeline_mode<synchronous>, transform_indices = @transform_3, window_bounds = array<i64: 128, 128>}, {pipeline_mode = #tpu.pipeline_mode<synchronous>, transform_indices = @transform_4, window_bounds = array<i64: 1, 128>}, {transform_indices = @transform_5, window_bounds = array<i64: 4, 8, 128>}]} {
    %c0_i32 = arith.constant 0 : i32
    %0 = arith.cmpi eq, %arg0, %c0_i32 : i32
    %1 = arith.extui %0 : i1 to i32
    %c0_i32_0 = arith.constant 0 : i32
    %2 = arith.cmpi ne, %1, %c0_i32_0 : i32
    scf.if %2 {
      %c0_60 = arith.constant 0 : index
      %c0_61 = arith.constant 0 : index
      %89 = vector.load %arg1[%c0_60, %c0_61] : memref<8x128xf32, #tpu.memory_space<vmem>>, vector<8x128xf32>
      %c0_62 = arith.constant 0 : index
      %c0_63 = arith.constant 0 : index
      %90 = vector.load %arg7[%c0_62, %c0_63] : memref<8x128xf32, #tpu.memory_space<vmem>>, vector<8x128xf32>
      tpu.vector_store %arg7[%c0_62, %c0_63], %89 {strides = array<i32>} : memref<8x128xf32, #tpu.memory_space<vmem>>, vector<8x128xf32>,
    } else {
    }
    %c0 = arith.constant 0 : index
    %c0_1 = arith.constant 0 : index
    %3 = vector.load %arg7[%c0, %c0_1] : memref<8x128xf32, #tpu.memory_space<vmem>>, vector<8x128xf32>
    %c0_i32_2 = arith.constant 0 : i32
    %4 = arith.index_cast %c0_i32_2 : i32 to index
    %c0_3 = arith.constant 0 : index
    %c0_4 = arith.constant 0 : index
    %5 = vector.load %arg2[%4, %c0_3, %c0_4] : memref<4x8x16xf32, #tpu.memory_space<vmem>>, vector<1x8x16xf32>
    %6 = vector.shape_cast %5 : vector<1x8x16xf32> to vector<8x16xf32>
    %c0_5 = arith.constant 0 : index
    %c0_6 = arith.constant 0 : index
    %7 = vector.load %arg3[%c0_5, %c0_6] : memref<16x128xf32, #tpu.memory_space<vmem>>, vector<16x128xf32>
    %cst = arith.constant dense<0.000000e+00> : vector<8x128xf32>
    %8 = tpu.matmul %6, %7, %cst {dimension_numbers = #tpu.dot_dimension_numbers<[1], [0], [0], [1], [0, 0, 1, 1], [], []>} : vector<8x16xf32>, vector<16x128xf32>, vector<8x128xf32> -> vector<8x128xf32>
    %c0_7 = arith.constant 0 : index
    %c0_8 = arith.constant 0 : index
    %9 = vector.load %arg5[%c0_7, %c0_8] : memref<1x128xf32, #tpu.memory_space<vmem>>, vector<1x128xf32>
    %10 = vector.broadcast %9 : vector<1x128xf32> to vector<8x128xf32>
    %11 = arith.addf %8, %10 : vector<8x128xf32>
    %12 = math.tanh %3 : vector<8x128xf32>
    %c0_9 = arith.constant 0 : index
    %c0_10 = arith.constant 0 : index
    %13 = vector.load %arg4[%c0_9, %c0_10] : memref<128x128xf32, #tpu.memory_space<vmem>>, vector<128x128xf32>
    %cst_11 = arith.constant dense<0.000000e+00> : vector<8x128xf32>
    %14 = tpu.matmul %12, %13, %cst_11 {dimension_numbers = #tpu.dot_dimension_numbers<[1], [0], [0], [1], [0, 0, 1, 1], [], []>} : vector<8x128xf32>, vector<128x128xf32>, vector<8x128xf32> -> vector<8x128xf32>
    %cst_12 = arith.constant 0.899999976 : f32
    %15 = vector.broadcast %cst_12 : f32 to vector<8x128xf32>
    %16 = arith.mulf %15, %3 : vector<8x128xf32>
    %17 = arith.addf %14, %11 : vector<8x128xf32>
    %cst_13 = arith.constant 1.000000e-01 : f32
    %18 = vector.broadcast %cst_13 : f32 to vector<8x128xf32>
    %19 = arith.mulf %18, %17 : vector<8x128xf32>
    %20 = arith.addf %16, %19 : vector<8x128xf32>
    %21 = arith.index_cast %c0_i32_2 : i32 to index
    %c0_14 = arith.constant 0 : index
    %c0_15 = arith.constant 0 : index
    %22 = vector.load %arg6[%21, %c0_14, %c0_15] : memref<4x8x128xf32, #tpu.memory_space<vmem>>, vector<1x8x128xf32>
    %23 = vector.shape_cast %22 : vector<1x8x128xf32> to vector<8x128xf32>
    %24 = vector.shape_cast %20 : vector<8x128xf32> to vector<1x8x128xf32>
    tpu.vector_store %arg6[%21, %c0_14, %c0_15], %24 {strides = array<i32>} : memref<4x8x128xf32, #tpu.memory_space<vmem>>, vector<1x8x128xf32>,
    %c1_i32 = arith.constant 1 : i32
    %25 = arith.index_cast %c1_i32 : i32 to index
    %c0_16 = arith.constant 0 : index
    %c0_17 = arith.constant 0 : index
    %26 = vector.load %arg2[%25, %c0_16, %c0_17] : memref<4x8x16xf32, #tpu.memory_space<vmem>>, vector<1x8x16xf32>
    %27 = vector.shape_cast %26 : vector<1x8x16xf32> to vector<8x16xf32>
    %c0_18 = arith.constant 0 : index
    %c0_19 = arith.constant 0 : index
    %28 = vector.load %arg3[%c0_18, %c0_19] : memref<16x128xf32, #tpu.memory_space<vmem>>, vector<16x128xf32>
    %cst_20 = arith.constant dense<0.000000e+00> : vector<8x128xf32>
    %29 = tpu.matmul %27, %28, %cst_20 {dimension_numbers = #tpu.dot_dimension_numbers<[1], [0], [0], [1], [0, 0, 1, 1], [], []>} : vector<8x16xf32>, vector<16x128xf32>, vector<8x128xf32> -> vector<8x128xf32>
    %c0_21 = arith.constant 0 : index
    %c0_22 = arith.constant 0 : index
    %30 = vector.load %arg5[%c0_21, %c0_22] : memref<1x128xf32, #tpu.memory_space<vmem>>, vector<1x128xf32>
    %31 = vector.broadcast %30 : vector<1x128xf32> to vector<8x128xf32>
    %32 = arith.addf %29, %31 : vector<8x128xf32>
    %33 = math.tanh %20 : vector<8x128xf32>
    %c0_23 = arith.constant 0 : index
    %c0_24 = arith.constant 0 : index
    %34 = vector.load %arg4[%c0_23, %c0_24] : memref<128x128xf32, #tpu.memory_space<vmem>>, vector<128x128xf32>
    %cst_25 = arith.constant dense<0.000000e+00> : vector<8x128xf32>
    %35 = tpu.matmul %33, %34, %cst_25 {dimension_numbers = #tpu.dot_dimension_numbers<[1], [0], [0], [1], [0, 0, 1, 1], [], []>} : vector<8x128xf32>, vector<128x128xf32>, vector<8x128xf32> -> vector<8x128xf32>
    %cst_26 = arith.constant 0.899999976 : f32
    %36 = vector.broadcast %cst_26 : f32 to vector<8x128xf32>
    %37 = arith.mulf %36, %20 : vector<8x128xf32>
    %38 = arith.addf %35, %32 : vector<8x128xf32>
    %cst_27 = arith.constant 1.000000e-01 : f32
    %39 = vector.broadcast %cst_27 : f32 to vector<8x128xf32>
    %40 = arith.mulf %39, %38 : vector<8x128xf32>
    %41 = arith.addf %37, %40 : vector<8x128xf32>
    %42 = arith.index_cast %c1_i32 : i32 to index
    %c0_28 = arith.constant 0 : index
    %c0_29 = arith.constant 0 : index
    %43 = vector.load %arg6[%42, %c0_28, %c0_29] : memref<4x8x128xf32, #tpu.memory_space<vmem>>, vector<1x8x128xf32>
    %44 = vector.shape_cast %43 : vector<1x8x128xf32> to vector<8x128xf32>
    %45 = vector.shape_cast %41 : vector<8x128xf32> to vector<1x8x128xf32>
    tpu.vector_store %arg6[%42, %c0_28, %c0_29], %45 {strides = array<i32>} : memref<4x8x128xf32, #tpu.memory_space<vmem>>, vector<1x8x128xf32>,
    %c2_i32 = arith.constant 2 : i32
    %46 = arith.index_cast %c2_i32 : i32 to index
    %c0_30 = arith.constant 0 : index
    %c0_31 = arith.constant 0 : index
    %47 = vector.load %arg2[%46, %c0_30, %c0_31] : memref<4x8x16xf32, #tpu.memory_space<vmem>>, vector<1x8x16xf32>
    %48 = vector.shape_cast %47 : vector<1x8x16xf32> to vector<8x16xf32>
    %c0_32 = arith.constant 0 : index
    %c0_33 = arith.constant 0 : index
    %49 = vector.load %arg3[%c0_32, %c0_33] : memref<16x128xf32, #tpu.memory_space<vmem>>, vector<16x128xf32>
    %cst_34 = arith.constant dense<0.000000e+00> : vector<8x128xf32>
    %50 = tpu.matmul %48, %49, %cst_34 {dimension_numbers = #tpu.dot_dimension_numbers<[1], [0], [0], [1], [0, 0, 1, 1], [], []>} : vector<8x16xf32>, vector<16x128xf32>, vector<8x128xf32> -> vector<8x128xf32>
    %c0_35 = arith.constant 0 : index
    %c0_36 = arith.constant 0 : index
    %51 = vector.load %arg5[%c0_35, %c0_36] : memref<1x128xf32, #tpu.memory_space<vmem>>, vector<1x128xf32>
    %52 = vector.broadcast %51 : vector<1x128xf32> to vector<8x128xf32>
    %53 = arith.addf %50, %52 : vector<8x128xf32>
    %54 = math.tanh %41 : vector<8x128xf32>
    %c0_37 = arith.constant 0 : index
    %c0_38 = arith.constant 0 : index
    %55 = vector.load %arg4[%c0_37, %c0_38] : memref<128x128xf32, #tpu.memory_space<vmem>>, vector<128x128xf32>
    %cst_39 = arith.constant dense<0.000000e+00> : vector<8x128xf32>
    %56 = tpu.matmul %54, %55, %cst_39 {dimension_numbers = #tpu.dot_dimension_numbers<[1], [0], [0], [1], [0, 0, 1, 1], [], []>} : vector<8x128xf32>, vector<128x128xf32>, vector<8x128xf32> -> vector<8x128xf32>
    %cst_40 = arith.constant 0.899999976 : f32
    %57 = vector.broadcast %cst_40 : f32 to vector<8x128xf32>
    %58 = arith.mulf %57, %41 : vector<8x128xf32>
    %59 = arith.addf %56, %53 : vector<8x128xf32>
    %cst_41 = arith.constant 1.000000e-01 : f32
    %60 = vector.broadcast %cst_41 : f32 to vector<8x128xf32>
    %61 = arith.mulf %60, %59 : vector<8x128xf32>
    %62 = arith.addf %58, %61 : vector<8x128xf32>
    %63 = arith.index_cast %c2_i32 : i32 to index
    %c0_42 = arith.constant 0 : index
    %c0_43 = arith.constant 0 : index
    %64 = vector.load %arg6[%63, %c0_42, %c0_43] : memref<4x8x128xf32, #tpu.memory_space<vmem>>, vector<1x8x128xf32>
    %65 = vector.shape_cast %64 : vector<1x8x128xf32> to vector<8x128xf32>
    %66 = vector.shape_cast %62 : vector<8x128xf32> to vector<1x8x128xf32>
    tpu.vector_store %arg6[%63, %c0_42, %c0_43], %66 {strides = array<i32>} : memref<4x8x128xf32, #tpu.memory_space<vmem>>, vector<1x8x128xf32>,
    %c3_i32 = arith.constant 3 : i32
    %67 = arith.index_cast %c3_i32 : i32 to index
    %c0_44 = arith.constant 0 : index
    %c0_45 = arith.constant 0 : index
    %68 = vector.load %arg2[%67, %c0_44, %c0_45] : memref<4x8x16xf32, #tpu.memory_space<vmem>>, vector<1x8x16xf32>
    %69 = vector.shape_cast %68 : vector<1x8x16xf32> to vector<8x16xf32>
    %c0_46 = arith.constant 0 : index
    %c0_47 = arith.constant 0 : index
    %70 = vector.load %arg3[%c0_46, %c0_47] : memref<16x128xf32, #tpu.memory_space<vmem>>, vector<16x128xf32>
    %cst_48 = arith.constant dense<0.000000e+00> : vector<8x128xf32>
    %71 = tpu.matmul %69, %70, %cst_48 {dimension_numbers = #tpu.dot_dimension_numbers<[1], [0], [0], [1], [0, 0, 1, 1], [], []>} : vector<8x16xf32>, vector<16x128xf32>, vector<8x128xf32> -> vector<8x128xf32>
    %c0_49 = arith.constant 0 : index
    %c0_50 = arith.constant 0 : index
    %72 = vector.load %arg5[%c0_49, %c0_50] : memref<1x128xf32, #tpu.memory_space<vmem>>, vector<1x128xf32>
    %73 = vector.broadcast %72 : vector<1x128xf32> to vector<8x128xf32>
    %74 = arith.addf %71, %73 : vector<8x128xf32>
    %75 = math.tanh %62 : vector<8x128xf32>
    %c0_51 = arith.constant 0 : index
    %c0_52 = arith.constant 0 : index
    %76 = vector.load %arg4[%c0_51, %c0_52] : memref<128x128xf32, #tpu.memory_space<vmem>>, vector<128x128xf32>
    %cst_53 = arith.constant dense<0.000000e+00> : vector<8x128xf32>
    %77 = tpu.matmul %75, %76, %cst_53 {dimension_numbers = #tpu.dot_dimension_numbers<[1], [0], [0], [1], [0, 0, 1, 1], [], []>} : vector<8x128xf32>, vector<128x128xf32>, vector<8x128xf32> -> vector<8x128xf32>
    %cst_54 = arith.constant 0.899999976 : f32
    %78 = vector.broadcast %cst_54 : f32 to vector<8x128xf32>
    %79 = arith.mulf %78, %62 : vector<8x128xf32>
    %80 = arith.addf %77, %74 : vector<8x128xf32>
    %cst_55 = arith.constant 1.000000e-01 : f32
    %81 = vector.broadcast %cst_55 : f32 to vector<8x128xf32>
    %82 = arith.mulf %81, %80 : vector<8x128xf32>
    %83 = arith.addf %79, %82 : vector<8x128xf32>
    %84 = arith.index_cast %c3_i32 : i32 to index
    %c0_56 = arith.constant 0 : index
    %c0_57 = arith.constant 0 : index
    %85 = vector.load %arg6[%84, %c0_56, %c0_57] : memref<4x8x128xf32, #tpu.memory_space<vmem>>, vector<1x8x128xf32>
    %86 = vector.shape_cast %85 : vector<1x8x128xf32> to vector<8x128xf32>
    %87 = vector.shape_cast %83 : vector<8x128xf32> to vector<1x8x128xf32>
    tpu.vector_store %arg6[%84, %c0_56, %c0_57], %87 {strides = array<i32>} : memref<4x8x128xf32, #tpu.memory_space<vmem>>, vector<1x8x128xf32>,
    %c4_i32 = arith.constant 4 : i32
    %c0_58 = arith.constant 0 : index
    %c0_59 = arith.constant 0 : index
    %88 = vector.load %arg7[%c0_58, %c0_59] : memref<8x128xf32, #tpu.memory_space<vmem>>, vector<8x128xf32>
    tpu.vector_store %arg7[%c0_58, %c0_59], %83 {strides = array<i32>} : memref<8x128xf32, #tpu.memory_space<vmem>>, vector<8x128xf32>,
    return
  }
  func.func @transform_0(%arg0: i32) -> (i32, i32) {
    %c0_i32 = arith.constant 0 : i32
    %c0_i32_0 = arith.constant 0 : i32
    %c0_i32_1 = arith.constant 0 : i32
    return %c0_i32, %c0_i32_0 : i32, i32
  }
  func.func @transform_1(%arg0: i32) -> (i32, i32, i32) {
    %c0_i32 = arith.constant 0 : i32
    %c0_i32_0 = arith.constant 0 : i32
    %c0_i32_1 = arith.constant 0 : i32
    return %arg0, %c0_i32, %c0_i32_0 : i32, i32, i32
  }
  func.func @transform_2(%arg0: i32) -> (i32, i32) {
    %c0_i32 = arith.constant 0 : i32
    %c0_i32_0 = arith.constant 0 : i32
    %c0_i32_1 = arith.constant 0 : i32
    return %c0_i32, %c0_i32_0 : i32, i32
  }
  func.func @transform_3(%arg0: i32) -> (i32, i32) {
    %c0_i32 = arith.constant 0 : i32
    %c0_i32_0 = arith.constant 0 : i32
    %c0_i32_1 = arith.constant 0 : i32
    return %c0_i32, %c0_i32_0 : i32, i32
  }
  func.func @transform_4(%arg0: i32) -> (i32, i32) {
    %c0_i32 = arith.constant 0 : i32
    %c0_i32_0 = arith.constant 0 : i32
    %c0_i32_1 = arith.constant 0 : i32
    return %c0_i32, %c0_i32_0 : i32, i32
  }
  func.func @transform_5(%arg0: i32) -> (i32, i32, i32) {
    %c0_i32 = arith.constant 0 : i32
    %c0_i32_0 = arith.constant 0 : i32
    %c0_i32_1 = arith.constant 0 : i32
    return %arg0, %c0_i32, %c0_i32_0 : i32, i32, i32
  }
}

</mosaic_0001>

<llo_original>
// kernel: tpu_custom_call.1
$region0: #{tpu_custom_call.1}
  #allocation0 [shape = 'u32[]', space=smem, size = 0x4, offset = 0x4, fixed_abs, tag = 'smem constant byte address 0x4 - core index']
  #allocation1 [shape = 'u32[144,128]{1,0:T(1,128)}', space=vmem, size = 0x12000, scoped, tag = 'internal scratch']
  #allocation2 [shape = 'f32[8,128]{1,0:T(8,128)}', space=vmem, size = 0x1000, scoped, tag = 'scratch operand']
  %s0 = inlined_call_operand.hbm [shape: f32[8,128], index: 0, kind: input, shape index: {}]
  %s1 = inlined_call_operand.hbm [shape: f32[8,8,16], index: 1, kind: input, shape index: {}]
  %s2 = inlined_call_operand.hbm [shape: f32[16,128], index: 2, kind: input, shape index: {}]
  %s3 = inlined_call_operand.hbm [shape: f32[128,128], index: 3, kind: input, shape index: {}]
  %s4 = inlined_call_operand.vmem [shape: f32[1,128], index: 4, kind: input, shape index: {}]
  %s5 = inlined_call_operand.hbm [shape: f32[8,8,128], index: 5, kind: output, shape index: {}]
  %s6 = sld [smem:[#allocation0]]
  $region73: #{tpu_custom_call.1} parent=0
    _
  %s8 = ssub.s32 1, %s6
  %s9 = scalar_select 0, %s8, %s6
  $region1: #{tpu_custom_call.1} parent=0
    #allocation3 [shape = 'u8[4096]{0}', space=vmem, size = 0x1000, scoped, tag = 'input window, operand 0, single buffered']
    #allocation4 [shape = 's32[2]{0}', space=sflag, size = 0x8, scoped, tag = 'scoped memory for tpu_custom_call.1']
    #allocation5 [shape = 's32[2]{0}', space=sflag, size = 0x8, scoped, tag = 'scoped memory for tpu_custom_call.1']
    #allocation6 [shape = 'u8[32768]{0}', space=vmem, size = 0x8000, scoped, tag = 'input window, operand 1']
    #allocation7 [shape = 's32[2]{0}', space=sflag, size = 0x8, scoped, tag = 'scoped memory for tpu_custom_call.1']
    #allocation8 [shape = 'u8[8192]{0}', space=vmem, size = 0x2000, scoped, tag = 'input window, operand 2, single buffered']
    #allocation9 [shape = 'u8[65536]{0}', space=vmem, size = 0x10000, scoped, tag = 'input window, operand 3, single buffered']
    #allocation10 [shape = 's32[1]{0}', space=sflag, size = 0x4, scoped, tag = 'scoped memory for tpu_custom_call.1']
    #allocation11 [shape = 'u8[32768]{0}', space=vmem, size = 0x8000, scoped, tag = 'output window, operand 0']
    %10 = vsyncpa [#allocation4], 0
    %11 = vsyncpa [#allocation7], 0
    %s12 = scalar_lea.sflag [#allocation7], 1
    %13 = vsyncpa %s12, 0
    %14 = vsyncpa [#allocation10], 0
    %15 = vsyncpa [#allocation5], 0
    %s16 = scalar_lea.sflag [#allocation5], 1
    %17 = vsyncpa %s16, 0
    loop: start=0, step=1, limit=4
    $region2: #{tpu_custom_call.1} parent=1 // loop_pre_header
      _
    $region3: #{tpu_custom_call.1} parent=1 // loop_header
      %s19 = sphi 0, %s23
      %p20 = scmp.ge.s32.totalorder %s19, 4
      %s27 = sphi 0, %s27
      %s29 = sphi 0, %s27
      %s30 = sphi 0, %s29
      %s44 = sphi 0, %s30
      %s50 = sphi 0, %s52
      %s53 = sphi 0, %s50
      %s54 = sphi 0, %s53
      %s70 = sphi 0, %s54
      %s74 = sphi 0, %s74
      %s76 = sphi 0, %s74
      %s77 = sphi 0, %s76
      %s91 = sphi 0, %s77
      %s95 = sphi 0, %s95
      %s97 = sphi 0, %s95
      %s98 = sphi 0, %s97
      %s112 = sphi 0, %s98
      %s116 = sphi 0, %s116
      %s118 = sphi 0, %s116
      %s119 = sphi 0, %s118
      %s133 = sphi 0, %s119
      %s139 = sphi 0, %s141
      %s142 = sphi 0, %s139
      %s143 = sphi 0, %s142
      %s159 = sphi 0, %s143
    $region4: #{tpu_custom_call.1} parent=1 // loop_header_branch
      %22 = sbr.rel (%p20) target = $region8
    $region5: #{tpu_custom_call.1} parent=1 // loop_body
      %s24 = ssub.s32 %s19, 1
      %s25 = ssub.s32 %s19, 2
      %s26 = sadd.s32 %s19, 1
      %s28 = sadd.s32 %s27, 1
      %p31 = scmp.eq.s32.totalorder %s19, 1
      %p32 = scmp.ne.s32.totalorder %s27, %s29
      %p33 = scmp.eq.s32.totalorder %s19, 0
      %p34 = por %p32, %p33
      %p35 = scmp.ne.s32.totalorder %s27, %s29
      %p36 = scmp.eq.s32.totalorder %s24, 1
      %p37 = por %p35, %p36
      %p38 = scmp.ne.s32.totalorder %s29, %s30
      %p39 = scmp.eq.s32.totalorder %s24, 0
      %p40 = por %p38, %p39
      %p41 = scmp.ne.s32.totalorder %s29, %s30
      %p42 = scmp.eq.s32.totalorder %s25, 1
      %p43 = por %p41, %p42
      %p45 = scmp.ne.s32.totalorder %s30, %s44
      %p46 = scmp.eq.s32.totalorder %s25, 0
      %p47 = por %p45, %p46
      %s48 = ssub.s32 %s19, %s26
      %p49 = scmp.eq.s32.totalorder %s48, 0
      %s51 = sadd.s32 %s50, 1
      %s52 = scalar_select %p49, %s50, %s51
      %p55 = pneg %p49
      %p56 = scmp.eq.s32.totalorder %s19, 1
      %p57 = por %p55, %p56
      %p58 = scmp.ne.s32.totalorder %s50, %s53
      %p59 = scmp.eq.s32.totalorder %s19, 0
      %p60 = por %p58, %p59
      %p61 = scmp.ne.s32.totalorder %s50, %s53
      %p62 = scmp.eq.s32.totalorder %s24, 1
      %p63 = por %p61, %p62
      %p64 = scmp.ne.s32.totalorder %s53, %s54
      %p65 = scmp.eq.s32.totalorder %s24, 0
      %p66 = por %p64, %p65
      %p67 = scmp.ne.s32.totalorder %s53, %s54
      %p68 = scmp.eq.s32.totalorder %s25, 1
      %p69 = por %p67, %p68
      %p71 = scmp.ne.s32.totalorder %s54, %s70
      %p72 = scmp.eq.s32.totalorder %s25, 0
      %p73 = por %p71, %p72
      %s75 = sadd.s32 %s74, 1
      %p78 = scmp.eq.s32.totalorder %s19, 1
      %p79 = scmp.ne.s32.totalorder %s74, %s76
      %p80 = scmp.eq.s32.totalorder %s19, 0
      %p81 = por %p79, %p80
      %p82 = scmp.ne.s32.totalorder %s74, %s76
      %p83 = scmp.eq.s32.totalorder %s24, 1
      %p84 = por %p82, %p83
      %p85 = scmp.ne.s32.totalorder %s76, %s77
      %p86 = scmp.eq.s32.totalorder %s24, 0
      %p87 = por %p85, %p86
      %p88 = scmp.ne.s32.totalorder %s76, %s77
      %p89 = scmp.eq.s32.totalorder %s25, 1
      %p90 = por %p88, %p89
      %p92 = scmp.ne.s32.totalorder %s77, %s91
      %p93 = scmp.eq.s32.totalorder %s25, 0
      %p94 = por %p92, %p93
      %s96 = sadd.s32 %s95, 1
      %p99 = scmp.eq.s32.totalorder %s19, 1
      %p100 = scmp.ne.s32.totalorder %s95, %s97
      %p101 = scmp.eq.s32.totalorder %s19, 0
      %p102 = por %p100, %p101
      %p103 = scmp.ne.s32.totalorder %s95, %s97
      %p104 = scmp.eq.s32.totalorder %s24, 1
      %p105 = por %p103, %p104
      %p106 = scmp.ne.s32.totalorder %s97, %s98
      %p107 = scmp.eq.s32.totalorder %s24, 0
      %p108 = por %p106, %p107
      %p109 = scmp.ne.s32.totalorder %s97, %s98
      %p110 = scmp.eq.s32.totalorder %s25, 1
      %p111 = por %p109, %p110
      %p113 = scmp.ne.s32.totalorder %s98, %s112
      %p114 = scmp.eq.s32.totalorder %s25, 0
      %p115 = por %p113, %p114
      %s117 = sadd.s32 %s116, 1
      %p120 = scmp.eq.s32.totalorder %s19, 1
      %p121 = scmp.ne.s32.totalorder %s116, %s118
      %p122 = scmp.eq.s32.totalorder %s19, 0
      %p123 = por %p121, %p122
      %p124 = scmp.ne.s32.totalorder %s116, %s118
      %p125 = scmp.eq.s32.totalorder %s24, 1
      %p126 = por %p124, %p125
      %p127 = scmp.ne.s32.totalorder %s118, %s119
      %p128 = scmp.eq.s32.totalorder %s24, 0
      %p129 = por %p127, %p128
      %p130 = scmp.ne.s32.totalorder %s118, %s119
      %p131 = scmp.eq.s32.totalorder %s25, 1
      %p132 = por %p130, %p131
      %p134 = scmp.ne.s32.totalorder %s119, %s133
      %p135 = scmp.eq.s32.totalorder %s25, 0
      %p136 = por %p134, %p135
      %s137 = ssub.s32 %s19, %s26
      %p138 = scmp.eq.s32.totalorder %s137, 0
      %s140 = sadd.s32 %s139, 1
      %s141 = scalar_select %p138, %s139, %s140
      %p144 = pneg %p138
      %p145 = scmp.eq.s32.totalorder %s19, 1
      %p146 = por %p144, %p145
      %p147 = scmp.ne.s32.totalorder %s139, %s142
      %p148 = scmp.eq.s32.totalorder %s19, 0
      %p149 = por %p147, %p148
      %p150 = scmp.ne.s32.totalorder %s139, %s142
      %p151 = scmp.eq.s32.totalorder %s24, 1
      %p152 = por %p150, %p151
      %p153 = scmp.ne.s32.totalorder %s142, %s143
      %p154 = scmp.eq.s32.totalorder %s24, 0
      %p155 = por %p153, %p154
      %p156 = scmp.ne.s32.totalorder %s142, %s143
      %p157 = scmp.eq.s32.totalorder %s25, 1
      %p158 = por %p156, %p157
      %p160 = scmp.ne.s32.totalorder %s143, %s159
      %p161 = scmp.eq.s32.totalorder %s25, 0
      %p162 = por %p160, %p161
      %p163 = scmp.le.s32.totalorder 1, %s19
      %p164 = scmp.lt.s32.totalorder %s19, 3
      %p165 = pnand %p163, %p164
      %p166 = pneg %p165
      // Predicated region
      $region9: #{tpu_custom_call.1} parent=5 // pred_check
        _
      $region10: #{tpu_custom_call.1} parent=5 // pred_check_branch
        %168 = sbr.rel (%p165) target = $region12
      $region11: #{tpu_custom_call.1} parent=5 // pred_region
        %s169 = ssub.s32 %s19, 1
        // Predicated region
        $region13: #{tpu_custom_call.1} parent=11 // pred_check
          %p170 = pneg %p40
        $region14: #{tpu_custom_call.1} parent=11 // pred_check_branch
          %172 = sbr.rel (%p170) target = $region16
        $region15: #{tpu_custom_call.1} parent=11 // pred_region
          %s174 = ssub.s32 128, 128
          %175 = vsyncadd [#allocation4], %s174
          %s177 = sshll.u32 [#allocation3], 4
          %s178 = int_to_ptr.vmem [resolvable:$true] %s177
          %180 = dma.hbm_to_vmem [thread:$0]  %s0, 128, %s178, [#allocation4]
        $region16: #{tpu_custom_call.1} parent=11 // pred_fallthru
          _
        // Predicated region
        $region17: #{tpu_custom_call.1} parent=11 // pred_check
          %p181 = pneg %p87
        $region18: #{tpu_custom_call.1} parent=11 // pred_check_branch
          %183 = sbr.rel (%p181) target = $region20
        $region19: #{tpu_custom_call.1} parent=11 // pred_region
          %s185 = ssub.s32 256, 256
          %186 = vsyncadd [#allocation7], %s185
          %s187 = sshll.u32 [#allocation8], 4
          %s188 = int_to_ptr.vmem [resolvable:$true] %s187
          %193 = dma.hbm_to_vmem [thread:$0]  %s2, 256, %s188, [#allocation7], 128, 128, 8
        $region20: #{tpu_custom_call.1} parent=11 // pred_fallthru
          _
        // Predicated region
        $region21: #{tpu_custom_call.1} parent=11 // pred_check
          %p194 = pneg %p108
        $region22: #{tpu_custom_call.1} parent=11 // pred_check_branch
          %196 = sbr.rel (%p194) target = $region24
        $region23: #{tpu_custom_call.1} parent=11 // pred_region
          %s198 = ssub.s32 2048, 2048
          %199 = vsyncadd [#allocation10], %s198
          %s200 = sshll.u32 [#allocation9], 4
          %s201 = int_to_ptr.vmem [resolvable:$true] %s200
          %206 = dma.hbm_to_vmem [thread:$0]  %s3, 2048, %s201, [#allocation10], 128, 128, 8
        $region24: #{tpu_custom_call.1} parent=11 // pred_fallthru
          _
        // Predicated region
        $region25: #{tpu_custom_call.1} parent=11 // pred_check
          %p207 = pneg %p129
        $region26: #{tpu_custom_call.1} parent=11 // pred_check_branch
          %209 = sbr.rel (%p207) target = $region28
        $region27: #{tpu_custom_call.1} parent=11 // pred_region
          _
        $region28: #{tpu_custom_call.1} parent=11 // pred_fallthru
          _
      $region12: #{tpu_custom_call.1} parent=5 // pred_fallthru
        _
      %p210 = scmp.lt.s32.totalorder %s19, 2
      // Predicated region
      $region29: #{tpu_custom_call.1} parent=5 // pred_check
        %p211 = pneg %p210
      $region30: #{tpu_custom_call.1} parent=5 // pred_check_branch
        %213 = sbr.rel (%p211) target = $region32
      $region31: #{tpu_custom_call.1} parent=5 // pred_region
        // Predicated region
        $region33: #{tpu_custom_call.1} parent=31 // pred_check
          %p214 = pneg %p60
        $region34: #{tpu_custom_call.1} parent=31 // pred_check_branch
          %216 = sbr.rel (%p214) target = $region36
        $region35: #{tpu_custom_call.1} parent=31 // pred_region
          %s217 = sand.u32 %s19, 1
          %s218 = scalar_lea.sflag [#allocation7], %s217
          %s219 = sand.u32 %s50, 1
          %s220 = smul.addr %s219, 32
          %s221 = scalar_lea.vmem [#allocation6], %s220
          %s222 = smul.u32 4, %s19
          %s224 = ssub.s32 512, 512
          %225 = vsyncadd %s218, %s224
          %s226 = smul.addr %s222, 128
          %s227 = scalar_lea.hbm %s1, %s226
          %s228 = sshll.u32 %s221, 4
          %s229 = int_to_ptr.vmem [resolvable:$true] %s228
          %234 = dma.hbm_to_vmem [thread:$0]  %s227, 512, %s229, %s218, 128, 128, 8
        $region36: #{tpu_custom_call.1} parent=31 // pred_fallthru
          _
      $region32: #{tpu_custom_call.1} parent=5 // pred_fallthru
        _
      %p235 = scmp.le.s32.totalorder 1, %s19
      %p236 = scmp.lt.s32.totalorder %s19, 3
      %p237 = pnand %p235, %p236
      %p238 = pneg %p237
      // Predicated region
      $region37: #{tpu_custom_call.1} parent=5 // pred_check
        _
      $region38: #{tpu_custom_call.1} parent=5 // pred_check_branch
        %240 = sbr.rel (%p237) target = $region40
      $region39: #{tpu_custom_call.1} parent=5 // pred_region
        %s241 = ssub.s32 %s19, 1
        // Predicated region
        $region41: #{tpu_custom_call.1} parent=39 // pred_check
          %p242 = pneg %p40
        $region42: #{tpu_custom_call.1} parent=39 // pred_check_branch
          %244 = sbr.rel (%p242) target = $region44
        $region43: #{tpu_custom_call.1} parent=39 // pred_region
          %245 = dma.done [#allocation4], 128
        $region44: #{tpu_custom_call.1} parent=39 // pred_fallthru
          _
        %s246 = sand.u32 %s24, 1
        %s247 = scalar_lea.sflag [#allocation7], %s246
        %s248 = sand.u32 %s53, 1
        %s249 = smul.addr %s248, 32
        %s250 = scalar_lea.vmem [#allocation6], %s249
        // Predicated region
        $region45: #{tpu_custom_call.1} parent=39 // pred_check
          %p251 = pneg %p66
        $region46: #{tpu_custom_call.1} parent=39 // pred_check_branch
          %253 = sbr.rel (%p251) target = $region48
        $region47: #{tpu_custom_call.1} parent=39 // pred_region
          %254 = dma.done %s247, 512
        $region48: #{tpu_custom_call.1} parent=39 // pred_fallthru
          _
        // Predicated region
        $region49: #{tpu_custom_call.1} parent=39 // pred_check
          %p255 = pneg %p87
        $region50: #{tpu_custom_call.1} parent=39 // pred_check_branch
          %257 = sbr.rel (%p255) target = $region52
        $region51: #{tpu_custom_call.1} parent=39 // pred_region
          %258 = dma.done [#allocation7], 256
        $region52: #{tpu_custom_call.1} parent=39 // pred_fallthru
          _
        // Predicated region
        $region53: #{tpu_custom_call.1} parent=39 // pred_check
          %p259 = pneg %p108
        $region54: #{tpu_custom_call.1} parent=39 // pred_check_branch
          %261 = sbr.rel (%p259) target = $region56
        $region55: #{tpu_custom_call.1} parent=39 // pred_region
          %262 = dma.done [#allocation10], 2048
        $region56: #{tpu_custom_call.1} parent=39 // pred_fallthru
          _
        %p263 = pneg %p40
        %p264 = pneg %p37
        %s265 = sand.u32 %s24, 1
        %s266 = scalar_lea.sflag [#allocation7], %s265
        %s267 = sand.u32 %s53, 1
        %s268 = smul.addr %s267, 32
        %s269 = scalar_lea.vmem [#allocation6], %s268
        %p270 = pneg %p66
        %p271 = pneg %p63
        %p272 = pneg %p87
        %p273 = pneg %p84
        %p274 = pneg %p108
        %p275 = pneg %p105
        %p276 = pneg %p129
        %p277 = pneg %p126
        %p278 = pneg %p155
        %p279 = pneg %p152
        %s280 = sand.u32 %s142, 1
        %s281 = scalar_lea.sflag [#allocation5], %s280
        %s282 = sand.u32 %s142, 1
        %s283 = smul.addr %s282, 32
        %s284 = scalar_lea.vmem [#allocation11], %s283
        %s285 = smul.u32 4, %s24
        %s286 = smul.u32 4, %s24
        %p287 = scmp.eq.s32.totalorder %s24, 0
        // Predicated region
        $region57: #{tpu_custom_call.1} parent=39 // pred_check
          %p288 = pneg %p287
        $region58: #{tpu_custom_call.1} parent=39 // pred_check_branch
          %290 = sbr.rel (%p288) target = $region60
        $region59: #{tpu_custom_call.1} parent=39 // pred_region
          %v291 = vld [vmem:[#allocation3] sm:$0xff]
          %292 = vst [vmem:[#allocation2] sm:$0xff] %v291
        $region60: #{tpu_custom_call.1} parent=39 // pred_fallthru
          _
        %v293 = vld [vmem:[#allocation2] sm:$0xff]
        %v294 = vld [vmem:[%s250] sm:$0xff]
        %v295 = vld [vmem:[#allocation8] sm:$0xff]
        %v296 = vld [vmem:[#allocation8 + $0x8] sm:$0xff]
        %v297 = vld [vmem:[%s4] sm:$0x1]
        %v299 = vlaneseq
        %v300 = vshrl.u32 %v299, 7
        %v301 = vsub.s32 0, %v300
        %v302 = vrot.slane %v297, %v301
        %vm304 = vcmask 130048
        %v306 = vsel %vm304, %v294, 0
        %308 = vmatprep.subr.mxu0 0.0
        %309 = vmatpush1.msra.mxu0 0.0
        %310 = vmatprep.subr.mxu0 0.0
        %311 = vmatpush1.msra.mxu0 0.0
        %312 = vmatprep.subr.mxu0 0.0
        %313 = vmatpush1.msra.mxu0 0.0
        %314 = vmatprep.subr.mxu0 0.0
        %315 = vmatpush1.msra.mxu0 0.0
        %316 = vmatprep.subr.mxu0 0.0
        %317 = vmatpush1.msra.mxu0 0.0
        %318 = vmatprep.subr.mxu0 0.0
        %319 = vmatpush1.msra.mxu0 0.0
        %320 = vmatprep.subr.mxu0 0.0
        %321 = vmatpush1.msra.mxu0 0.0
        %322 = vmatprep.subr.mxu0 0.0
        %323 = vmatpush1.msra.mxu0 0.0
        %324 = vmatprep.subr.mxu0 0.0
        %325 = vmatpush1.msra.mxu0 0.0
        %326 = vmatprep.subr.mxu0 0.0
        %327 = vmatpush1.msra.mxu0 0.0
        %328 = vmatprep.subr.mxu0 0.0
        %329 = vmatpush1.msra.mxu0 0.0
        %330 = vmatprep.subr.mxu0 0.0
        %331 = vmatpush1.msra.mxu0 0.0
        %332 = vmatprep.subr.mxu0 0.0
        %333 = vmatpush1.msra.mxu0 0.0
        %334 = vmatprep.subr.mxu0 0.0
        %335 = vmatpush1.msra.mxu0 0.0
        %336 = vmatprep.subr.mxu0 0.0
        %337 = vmatpush1.msra.mxu0 %v296
        %338 = vmatprep.subr.mxu0 0.0
        %339 = vmatpush1.msra.mxu0 %v295
        %340 = vmatprep.subr.mxu0 0.0
        %341 = vmatpush2.msra.mxu0 0.0
        %342 = vmatprep.subr.mxu0 0.0
        %343 = vmatpush2.msra.mxu0 0.0
        %344 = vmatprep.subr.mxu0 0.0
        %345 = vmatpush2.msra.mxu0 0.0
        %346 = vmatprep.subr.mxu0 0.0
        %347 = vmatpush2.msra.mxu0 0.0
        %348 = vmatprep.subr.mxu0 0.0
        %349 = vmatpush2.msra.mxu0 0.0
        %350 = vmatprep.subr.mxu0 0.0
        %351 = vmatpush2.msra.mxu0 0.0
        %352 = vmatprep.subr.mxu0 0.0
        %353 = vmatpush2.msra.mxu0 0.0
        %354 = vmatprep.subr.mxu0 0.0
        %355 = vmatpush2.msra.mxu0 0.0
        %356 = vmatprep.subr.mxu0 0.0
        %357 = vmatpush2.msra.mxu0 0.0
        %358 = vmatprep.subr.mxu0 0.0
        %359 = vmatpush2.msra.mxu0 0.0
        %360 = vmatprep.subr.mxu0 0.0
        %361 = vmatpush2.msra.mxu0 0.0
        %362 = vmatprep.subr.mxu0 0.0
        %363 = vmatpush2.msra.mxu0 0.0
        %364 = vmatprep.subr.mxu0 0.0
        %365 = vmatpush2.msra.mxu0 0.0
        %366 = vmatprep.subr.mxu0 0.0
        %367 = vmatpush2.msra.mxu0 0.0
        %368 = vmatprep.subr.mxu0 0.0
        %369 = vmatpush2.msra.mxu0 0.0
        %370 = vmatprep.subr.mxu0 0.0
        %371 = vmatpush2.msra.mxu0 0.0
        %372 = vmatprep.mubr.f32.mxu0 0.0
        %373 = vmatmul.mubr.f32.gmra.mxu0 %v306
        %v374 = vpop.f32.mrf.mxu0
        %v375 = vadd.f32 %v302, %v374
        %v376 = vpop.f32.mrf.mxu0
        %377 = vdwg.mxu0
        %v378 = vtanh.pop %v293
        %v379 = vld [vmem:[#allocation9] sm:$0xff]
        %v380 = vld [vmem:[#allocation9 + $0x8] sm:$0xff]
        %v381 = vld [vmem:[#allocation9 + $0x10] sm:$0xff]
        %v382 = vld [vmem:[#allocation9 + $0x18] sm:$0xff]
        %v383 = vld [vmem:[#allocation9 + $0x20] sm:$0xff]
        %v384 = vld [vmem:[#allocation9 + $0x28] sm:$0xff]
        %v385 = vld [vmem:[#allocation9 + $0x30] sm:$0xff]
        %v386 = vld [vmem:[#allocation9 + $0x38] sm:$0xff]
        %v387 = vld [vmem:[#allocation9 + $0x40] sm:$0xff]
        %v388 = vld [vmem:[#allocation9 + $0x48] sm:$0xff]
        %v389 = vld [vmem:[#allocation9 + $0x50] sm:$0xff]
        %v390 = vld [vmem:[#allocation9 + $0x58] sm:$0xff]
        %v391 = vld [vmem:[#allocation9 + $0x60] sm:$0xff]
        %v392 = vld [vmem:[#allocation9 + $0x68] sm:$0xff]
        %v393 = vld [vmem:[#allocation9 + $0x70] sm:$0xff]
        %v394 = vld [vmem:[#allocation9 + $0x78] sm:$0xff]
        %v395 = vmul.f32 %v293, 0.9
        %396 = vmatprep.subr.mxu0 0.0
        %397 = vmatpush1.msra.mxu0 %v394
        %398 = vmatprep.subr.mxu0 0.0
        %399 = vmatpush1.msra.mxu0 %v393
        %400 = vmatprep.subr.mxu0 0.0
        %401 = vmatpush1.msra.mxu0 %v392
        %402 = vmatprep.subr.mxu0 0.0
        %403 = vmatpush1.msra.mxu0 %v391
        %404 = vmatprep.subr.mxu0 0.0
        %405 = vmatpush1.msra.mxu0 %v390
        %406 = vmatprep.subr.mxu0 0.0
        %407 = vmatpush1.msra.mxu0 %v389
        %408 = vmatprep.subr.mxu0 0.0
        %409 = vmatpush1.msra.mxu0 %v388
        %410 = vmatprep.subr.mxu0 0.0
        %411 = vmatpush1.msra.mxu0 %v387
        %412 = vmatprep.subr.mxu0 0.0
        %413 = vmatpush1.msra.mxu0 %v386
        %414 = vmatprep.subr.mxu0 0.0
        %415 = vmatpush1.msra.mxu0 %v385
        %416 = vmatprep.subr.mxu0 0.0
        %417 = vmatpush1.msra.mxu0 %v384
        %418 = vmatprep.subr.mxu0 0.0
        %419 = vmatpush1.msra.mxu0 %v383
        %420 = vmatprep.subr.mxu0 0.0
        %421 = vmatpush1.msra.mxu0 %v382
        %422 = vmatprep.subr.mxu0 0.0
        %423 = vmatpush1.msra.mxu0 %v381
        %424 = vmatprep.subr.mxu0 0.0
        %425 = vmatpush1.msra.mxu0 %v380
        %426 = vmatprep.subr.mxu0 0.0
        %427 = vmatpush1.msra.mxu0 %v379
        %428 = vmatprep.subr.mxu0 0.0
        %429 = vmatpush2.msra.mxu0 0.0
        %430 = vmatprep.subr.mxu0 0.0
        %431 = vmatpush2.msra.mxu0 0.0
        %432 = vmatprep.subr.mxu0 0.0
        %433 = vmatpush2.msra.mxu0 0.0
        %434 = vmatprep.subr.mxu0 0.0
        %435 = vmatpush2.msra.mxu0 0.0
        %436 = vmatprep.subr.mxu0 0.0
        %437 = vmatpush2.msra.mxu0 0.0
        %438 = vmatprep.subr.mxu0 0.0
        %439 = vmatpush2.msra.mxu0 0.0
        %440 = vmatprep.subr.mxu0 0.0
        %441 = vmatpush2.msra.mxu0 0.0
        %442 = vmatprep.subr.mxu0 0.0
        %443 = vmatpush2.msra.mxu0 0.0
        %444 = vmatprep.subr.mxu0 0.0
        %445 = vmatpush2.msra.mxu0 0.0
        %446 = vmatprep.subr.mxu0 0.0
        %447 = vmatpush2.msra.mxu0 0.0
        %448 = vmatprep.subr.mxu0 0.0
        %449 = vmatpush2.msra.mxu0 0.0
        %450 = vmatprep.subr.mxu0 0.0
        %451 = vmatpush2.msra.mxu0 0.0
        %452 = vmatprep.subr.mxu0 0.0
        %453 = vmatpush2.msra.mxu0 0.0
        %454 = vmatprep.subr.mxu0 0.0
        %455 = vmatpush2.msra.mxu0 0.0
        %456 = vmatprep.subr.mxu0 0.0
        %457 = vmatpush2.msra.mxu0 0.0
        %458 = vmatprep.subr.mxu0 0.0
        %459 = vmatpush2.msra.mxu0 0.0
        %460 = vmatprep.mubr.f32.mxu0 0.0
        %461 = vmatmul.mubr.f32.gmra.mxu0 %v378
        %v462 = vpop.f32.mrf.mxu0
        %v463 = vadd.f32 %v375, %v462
        %v464 = vpop.f32.mrf.mxu0
        %465 = vdwg.mxu0
        %v466 = vmul.f32 %v463, 0.1
        %v467 = vadd.f32 %v395, %v466
        %468 = vst [vmem:[%s284] sm:$0xff] %v467
        %s469 = scalar_lea.vmem %s250, 8 [#allocation6]
        %v470 = vld [vmem:[%s469] sm:$0xff]
        %v471 = vld [vmem:[#allocation8] sm:$0xff]
        %v472 = vld [vmem:[#allocation8 + $0x8] sm:$0xff]
        %v473 = vld [vmem:[%s4] sm:$0x1]
        %v475 = vlaneseq
        %v476 = vshrl.u32 %v475, 7
        %v477 = vsub.s32 0, %v476
        %v478 = vrot.slane %v473, %v477
        %v481 = vsel %vm304, %v470, 0
        %483 = vmatprep.subr.mxu0 0.0
        %484 = vmatpush1.msra.mxu0 0.0
        %485 = vmatprep.subr.mxu0 0.0
        %486 = vmatpush1.msra.mxu0 0.0
        %487 = vmatprep.subr.mxu0 0.0
        %488 = vmatpush1.msra.mxu0 0.0
        %489 = vmatprep.subr.mxu0 0.0
        %490 = vmatpush1.msra.mxu0 0.0
        %491 = vmatprep.subr.mxu0 0.0
        %492 = vmatpush1.msra.mxu0 0.0
        %493 = vmatprep.subr.mxu0 0.0
        %494 = vmatpush1.msra.mxu0 0.0
        %495 = vmatprep.subr.mxu0 0.0
        %496 = vmatpush1.msra.mxu0 0.0
        %497 = vmatprep.subr.mxu0 0.0
        %498 = vmatpush1.msra.mxu0 0.0
        %499 = vmatprep.subr.mxu0 0.0
        %500 = vmatpush1.msra.mxu0 0.0
        %501 = vmatprep.subr.mxu0 0.0
        %502 = vmatpush1.msra.mxu0 0.0
        %503 = vmatprep.subr.mxu0 0.0
        %504 = vmatpush1.msra.mxu0 0.0
        %505 = vmatprep.subr.mxu0 0.0
        %506 = vmatpush1.msra.mxu0 0.0
        %507 = vmatprep.subr.mxu0 0.0
        %508 = vmatpush1.msra.mxu0 0.0
        %509 = vmatprep.subr.mxu0 0.0
        %510 = vmatpush1.msra.mxu0 0.0
        %511 = vmatprep.subr.mxu0 0.0
        %512 = vmatpush1.msra.mxu0 %v472
        %513 = vmatprep.subr.mxu0 0.0
        %514 = vmatpush1.msra.mxu0 %v471
        %515 = vmatprep.subr.mxu0 0.0
        %516 = vmatpush2.msra.mxu0 0.0
        %517 = vmatprep.subr.mxu0 0.0
        %518 = vmatpush2.msra.mxu0 0.0
        %519 = vmatprep.subr.mxu0 0.0
        %520 = vmatpush2.msra.mxu0 0.0
        %521 = vmatprep.subr.mxu0 0.0
        %522 = vmatpush2.msra.mxu0 0.0
        %523 = vmatprep.subr.mxu0 0.0
        %524 = vmatpush2.msra.mxu0 0.0
        %525 = vmatprep.subr.mxu0 0.0
        %526 = vmatpush2.msra.mxu0 0.0
        %527 = vmatprep.subr.mxu0 0.0
        %528 = vmatpush2.msra.mxu0 0.0
        %529 = vmatprep.subr.mxu0 0.0
        %530 = vmatpush2.msra.mxu0 0.0
        %531 = vmatprep.subr.mxu0 0.0
        %532 = vmatpush2.msra.mxu0 0.0
        %533 = vmatprep.subr.mxu0 0.0
        %534 = vmatpush2.msra.mxu0 0.0
        %535 = vmatprep.subr.mxu0 0.0
        %536 = vmatpush2.msra.mxu0 0.0
        %537 = vmatprep.subr.mxu0 0.0
        %538 = vmatpush2.msra.mxu0 0.0
        %539 = vmatprep.subr.mxu0 0.0
        %540 = vmatpush2.msra.mxu0 0.0
        %541 = vmatprep.subr.mxu0 0.0
        %542 = vmatpush2.msra.mxu0 0.0
        %543 = vmatprep.subr.mxu0 0.0
        %544 = vmatpush2.msra.mxu0 0.0
        %545 = vmatprep.subr.mxu0 0.0
        %546 = vmatpush2.msra.mxu0 0.0
        %547 = vmatprep.mubr.f32.mxu0 0.0
        %548 = vmatmul.mubr.f32.gmra.mxu0 %v481
        %v549 = vpop.f32.mrf.mxu0
        %v550 = vadd.f32 %v478, %v549
        %v551 = vpop.f32.mrf.mxu0
        %552 = vdwg.mxu0
        %v553 = vtanh.pop %v467
        %v554 = vld [vmem:[#allocation9] sm:$0xff]
        %v555 = vld [vmem:[#allocation9 + $0x8] sm:$0xff]
        %v556 = vld [vmem:[#allocation9 + $0x10] sm:$0xff]
        %v557 = vld [vmem:[#allocation9 + $0x18] sm:$0xff]
        %v558 = vld [vmem:[#allocation9 + $0x20] sm:$0xff]
        %v559 = vld [vmem:[#allocation9 + $0x28] sm:$0xff]
        %v560 = vld [vmem:[#allocation9 + $0x30] sm:$0xff]
        %v561 = vld [vmem:[#allocation9 + $0x38] sm:$0xff]
        %v562 = vld [vmem:[#allocation9 + $0x40] sm:$0xff]
        %v563 = vld [vmem:[#allocation9 + $0x48] sm:$0xff]
        %v564 = vld [vmem:[#allocation9 + $0x50] sm:$0xff]
        %v565 = vld [vmem:[#allocation9 + $0x58] sm:$0xff]
        %v566 = vld [vmem:[#allocation9 + $0x60] sm:$0xff]
        %v567 = vld [vmem:[#allocation9 + $0x68] sm:$0xff]
        %v568 = vld [vmem:[#allocation9 + $0x70] sm:$0xff]
        %v569 = vld [vmem:[#allocation9 + $0x78] sm:$0xff]
        %v570 = vmul.f32 %v467, 0.9
        %571 = vmatprep.subr.mxu0 0.0
        %572 = vmatpush1.msra.mxu0 %v569
        %573 = vmatprep.subr.mxu0 0.0
        %574 = vmatpush1.msra.mxu0 %v568
        %575 = vmatprep.subr.mxu0 0.0
        %576 = vmatpush1.msra.mxu0 %v567
        %577 = vmatprep.subr.mxu0 0.0
        %578 = vmatpush1.msra.mxu0 %v566
        %579 = vmatprep.subr.mxu0 0.0
        %580 = vmatpush1.msra.mxu0 %v565
        %581 = vmatprep.subr.mxu0 0.0
        %582 = vmatpush1.msra.mxu0 %v564
        %583 = vmatprep.subr.mxu0 0.0
        %584 = vmatpush1.msra.mxu0 %v563
        %585 = vmatprep.subr.mxu0 0.0
        %586 = vmatpush1.msra.mxu0 %v562
        %587 = vmatprep.subr.mxu0 0.0
        %588 = vmatpush1.msra.mxu0 %v561
        %589 = vmatprep.subr.mxu0 0.0
        %590 = vmatpush1.msra.mxu0 %v560
        %591 = vmatprep.subr.mxu0 0.0
        %592 = vmatpush1.msra.mxu0 %v559
        %593 = vmatprep.subr.mxu0 0.0
        %594 = vmatpush1.msra.mxu0 %v558
        %595 = vmatprep.subr.mxu0 0.0
        %596 = vmatpush1.msra.mxu0 %v557
        %597 = vmatprep.subr.mxu0 0.0
        %598 = vmatpush1.msra.mxu0 %v556
        %599 = vmatprep.subr.mxu0 0.0
        %600 = vmatpush1.msra.mxu0 %v555
        %601 = vmatprep.subr.mxu0 0.0
        %602 = vmatpush1.msra.mxu0 %v554
        %603 = vmatprep.subr.mxu0 0.0
        %604 = vmatpush2.msra.mxu0 0.0
        %605 = vmatprep.subr.mxu0 0.0
        %606 = vmatpush2.msra.mxu0 0.0
        %607 = vmatprep.subr.mxu0 0.0
        %608 = vmatpush2.msra.mxu0 0.0
        %609 = vmatprep.subr.mxu0 0.0
        %610 = vmatpush2.msra.mxu0 0.0
        %611 = vmatprep.subr.mxu0 0.0
        %612 = vmatpush2.msra.mxu0 0.0
        %613 = vmatprep.subr.mxu0 0.0
        %614 = vmatpush2.msra.mxu0 0.0
        %615 = vmatprep.subr.mxu0 0.0
        %616 = vmatpush2.msra.mxu0 0.0
        %617 = vmatprep.subr.mxu0 0.0
        %618 = vmatpush2.msra.mxu0 0.0
        %619 = vmatprep.subr.mxu0 0.0
        %620 = vmatpush2.msra.mxu0 0.0
        %621 = vmatprep.subr.mxu0 0.0
        %622 = vmatpush2.msra.mxu0 0.0
        %623 = vmatprep.subr.mxu0 0.0
        %624 = vmatpush2.msra.mxu0 0.0
        %625 = vmatprep.subr.mxu0 0.0
        %626 = vmatpush2.msra.mxu0 0.0
        %627 = vmatprep.subr.mxu0 0.0
        %628 = vmatpush2.msra.mxu0 0.0
        %629 = vmatprep.subr.mxu0 0.0
        %630 = vmatpush2.msra.mxu0 0.0
        %631 = vmatprep.subr.mxu0 0.0
        %632 = vmatpush2.msra.mxu0 0.0
        %633 = vmatprep.subr.mxu0 0.0
        %634 = vmatpush2.msra.mxu0 0.0
        %635 = vmatprep.mubr.f32.mxu0 0.0
        %636 = vmatmul.mubr.f32.gmra.mxu0 %v553
        %v637 = vpop.f32.mrf.mxu0
        %v638 = vadd.f32 %v550, %v637
        %v639 = vpop.f32.mrf.mxu0
        %640 = vdwg.mxu0
        %v641 = vmul.f32 %v638, 0.1
        %v642 = vadd.f32 %v570, %v641
        %s643 = scalar_lea.vmem %s284, 8 [#allocation11]
        %644 = vst [vmem:[%s643] sm:$0xff] %v642
        %s645 = scalar_lea.vmem %s250, 16 [#allocation6]
        %v646 = vld [vmem:[%s645] sm:$0xff]
        %v647 = vld [vmem:[#allocation8] sm:$0xff]
        %v648 = vld [vmem:[#allocation8 + $0x8] sm:$0xff]
        %v649 = vld [vmem:[%s4] sm:$0x1]
        %v651 = vlaneseq
        %v652 = vshrl.u32 %v651, 7
        %v653 = vsub.s32 0, %v652
        %v654 = vrot.slane %v649, %v653
        %v657 = vsel %vm304, %v646, 0
        %659 = vmatprep.subr.mxu0 0.0
        %660 = vmatpush1.msra.mxu0 0.0
        %661 = vmatprep.subr.mxu0 0.0
        %662 = vmatpush1.msra.mxu0 0.0
        %663 = vmatprep.subr.mxu0 0.0
        %664 = vmatpush1.msra.mxu0 0.0
        %665 = vmatprep.subr.mxu0 0.0
        %666 = vmatpush1.msra.mxu0 0.0
        %667 = vmatprep.subr.mxu0 0.0
        %668 = vmatpush1.msra.mxu0 0.0
        %669 = vmatprep.subr.mxu0 0.0
        %670 = vmatpush1.msra.mxu0 0.0
        %671 = vmatprep.subr.mxu0 0.0
        %672 = vmatpush1.msra.mxu0 0.0
        %673 = vmatprep.subr.mxu0 0.0
        %674 = vmatpush1.msra.mxu0 0.0
        %675 = vmatprep.subr.mxu0 0.0
        %676 = vmatpush1.msra.mxu0 0.0
        %677 = vmatprep.subr.mxu0 0.0
        %678 = vmatpush1.msra.mxu0 0.0
        %679 = vmatprep.subr.mxu0 0.0
        %680 = vmatpush1.msra.mxu0 0.0
        %681 = vmatprep.subr.mxu0 0.0
        %682 = vmatpush1.msra.mxu0 0.0
        %683 = vmatprep.subr.mxu0 0.0
        %684 = vmatpush1.msra.mxu0 0.0
        %685 = vmatprep.subr.mxu0 0.0
        %686 = vmatpush1.msra.mxu0 0.0
        %687 = vmatprep.subr.mxu0 0.0
        %688 = vmatpush1.msra.mxu0 %v648
        %689 = vmatprep.subr.mxu0 0.0
        %690 = vmatpush1.msra.mxu0 %v647
        %691 = vmatprep.subr.mxu0 0.0
        %692 = vmatpush2.msra.mxu0 0.0
        %693 = vmatprep.subr.mxu0 0.0
        %694 = vmatpush2.msra.mxu0 0.0
        %695 = vmatprep.subr.mxu0 0.0
        %696 = vmatpush2.msra.mxu0 0.0
        %697 = vmatprep.subr.mxu0 0.0
        %698 = vmatpush2.msra.mxu0 0.0
        %699 = vmatprep.subr.mxu0 0.0
        %700 = vmatpush2.msra.mxu0 0.0
        %701 = vmatprep.subr.mxu0 0.0
        %702 = vmatpush2.msra.mxu0 0.0
        %703 = vmatprep.subr.mxu0 0.0
        %704 = vmatpush2.msra.mxu0 0.0
        %705 = vmatprep.subr.mxu0 0.0
        %706 = vmatpush2.msra.mxu0 0.0
        %707 = vmatprep.subr.mxu0 0.0
        %708 = vmatpush2.msra.mxu0 0.0
        %709 = vmatprep.subr.mxu0 0.0
        %710 = vmatpush2.msra.mxu0 0.0
        %711 = vmatprep.subr.mxu0 0.0
        %712 = vmatpush2.msra.mxu0 0.0
        %713 = vmatprep.subr.mxu0 0.0
        %714 = vmatpush2.msra.mxu0 0.0
        %715 = vmatprep.subr.mxu0 0.0
        %716 = vmatpush2.msra.mxu0 0.0
        %717 = vmatprep.subr.mxu0 0.0
        %718 = vmatpush2.msra.mxu0 0.0
        %719 = vmatprep.subr.mxu0 0.0
        %720 = vmatpush2.msra.mxu0 0.0
        %721 = vmatprep.subr.mxu0 0.0
        %722 = vmatpush2.msra.mxu0 0.0
        %723 = vmatprep.mubr.f32.mxu0 0.0
        %724 = vmatmul.mubr.f32.gmra.mxu0 %v657
        %v725 = vpop.f32.mrf.mxu0
        %v726 = vadd.f32 %v654, %v725
        %v727 = vpop.f32.mrf.mxu0
        %728 = vdwg.mxu0
        %v729 = vtanh.pop %v642
        %v730 = vld [vmem:[#allocation9] sm:$0xff]
        %v731 = vld [vmem:[#allocation9 + $0x8] sm:$0xff]
        %v732 = vld [vmem:[#allocation9 + $0x10] sm:$0xff]
        %v733 = vld [vmem:[#allocation9 + $0x18] sm:$0xff]
        %v734 = vld [vmem:[#allocation9 + $0x20] sm:$0xff]
        %v735 = vld [vmem:[#allocation9 + $0x28] sm:$0xff]
        %v736 = vld [vmem:[#allocation9 + $0x30] sm:$0xff]
        %v737 = vld [vmem:[#allocation9 + $0x38] sm:$0xff]
        %v738 = vld [vmem:[#allocation9 + $0x40] sm:$0xff]
        %v739 = vld [vmem:[#allocation9 + $0x48] sm:$0xff]
        %v740 = vld [vmem:[#allocation9 + $0x50] sm:$0xff]
        %v741 = vld [vmem:[#allocation9 + $0x58] sm:$0xff]
        %v742 = vld [vmem:[#allocation9 + $0x60] sm:$0xff]
        %v743 = vld [vmem:[#allocation9 + $0x68] sm:$0xff]
        %v744 = vld [vmem:[#allocation9 + $0x70] sm:$0xff]
        %v745 = vld [vmem:[#allocation9 + $0x78] sm:$0xff]
        %v746 = vmul.f32 %v642, 0.9
        %747 = vmatprep.subr.mxu0 0.0
        %748 = vmatpush1.msra.mxu0 %v745
        %749 = vmatprep.subr.mxu0 0.0
        %750 = vmatpush1.msra.mxu0 %v744
        %751 = vmatprep.subr.mxu0 0.0
        %752 = vmatpush1.msra.mxu0 %v743
        %753 = vmatprep.subr.mxu0 0.0
        %754 = vmatpush1.msra.mxu0 %v742
        %755 = vmatprep.subr.mxu0 0.0
        %756 = vmatpush1.msra.mxu0 %v741
        %757 = vmatprep.subr.mxu0 0.0
        %758 = vmatpush1.msra.mxu0 %v740
        %759 = vmatprep.subr.mxu0 0.0
        %760 = vmatpush1.msra.mxu0 %v739
        %761 = vmatprep.subr.mxu0 0.0
        %762 = vmatpush1.msra.mxu0 %v738
        %763 = vmatprep.subr.mxu0 0.0
        %764 = vmatpush1.msra.mxu0 %v737
        %765 = vmatprep.subr.mxu0 0.0
        %766 = vmatpush1.msra.mxu0 %v736
        %767 = vmatprep.subr.mxu0 0.0
        %768 = vmatpush1.msra.mxu0 %v735
        %769 = vmatprep.subr.mxu0 0.0
        %770 = vmatpush1.msra.mxu0 %v734
        %771 = vmatprep.subr.mxu0 0.0
        %772 = vmatpush1.msra.mxu0 %v733
        %773 = vmatprep.subr.mxu0 0.0
        %774 = vmatpush1.msra.mxu0 %v732
        %775 = vmatprep.subr.mxu0 0.0
        %776 = vmatpush1.msra.mxu0 %v731
        %777 = vmatprep.subr.mxu0 0.0
        %778 = vmatpush1.msra.mxu0 %v730
        %779 = vmatprep.subr.mxu0 0.0
        %780 = vmatpush2.msra.mxu0 0.0
        %781 = vmatprep.subr.mxu0 0.0
        %782 = vmatpush2.msra.mxu0 0.0
        %783 = vmatprep.subr.mxu0 0.0
        %784 = vmatpush2.msra.mxu0 0.0
        %785 = vmatprep.subr.mxu0 0.0
        %786 = vmatpush2.msra.mxu0 0.0
        %787 = vmatprep.subr.mxu0 0.0
        %788 = vmatpush2.msra.mxu0 0.0
        %789 = vmatprep.subr.mxu0 0.0
        %790 = vmatpush2.msra.mxu0 0.0
        %791 = vmatprep.subr.mxu0 0.0
        %792 = vmatpush2.msra.mxu0 0.0
        %793 = vmatprep.subr.mxu0 0.0
        %794 = vmatpush2.msra.mxu0 0.0
        %795 = vmatprep.subr.mxu0 0.0
        %796 = vmatpush2.msra.mxu0 0.0
        %797 = vmatprep.subr.mxu0 0.0
        %798 = vmatpush2.msra.mxu0 0.0
        %799 = vmatprep.subr.mxu0 0.0
        %800 = vmatpush2.msra.mxu0 0.0
        %801 = vmatprep.subr.mxu0 0.0
        %802 = vmatpush2.msra.mxu0 0.0
        %803 = vmatprep.subr.mxu0 0.0
        %804 = vmatpush2.msra.mxu0 0.0
        %805 = vmatprep.subr.mxu0 0.0
        %806 = vmatpush2.msra.mxu0 0.0
        %807 = vmatprep.subr.mxu0 0.0
        %808 = vmatpush2.msra.mxu0 0.0
        %809 = vmatprep.subr.mxu0 0.0
        %810 = vmatpush2.msra.mxu0 0.0
        %811 = vmatprep.mubr.f32.mxu0 0.0
        %812 = vmatmul.mubr.f32.gmra.mxu0 %v729
        %v813 = vpop.f32.mrf.mxu0
        %v814 = vadd.f32 %v726, %v813
        %v815 = vpop.f32.mrf.mxu0
        %816 = vdwg.mxu0
        %v817 = vmul.f32 %v814, 0.1
        %v818 = vadd.f32 %v746, %v817
        %s819 = scalar_lea.vmem %s284, 16 [#allocation11]
        %820 = vst [vmem:[%s819] sm:$0xff] %v818
        %s821 = scalar_lea.vmem %s250, 24 [#allocation6]
        %v822 = vld [vmem:[%s821] sm:$0xff]
        %v823 = vld [vmem:[#allocation8] sm:$0xff]
        %v824 = vld [vmem:[#allocation8 + $0x8] sm:$0xff]
        %v825 = vld [vmem:[%s4] sm:$0x1]
        %v827 = vlaneseq
        %v828 = vshrl.u32 %v827, 7
        %v829 = vsub.s32 0, %v828
        %v830 = vrot.slane %v825, %v829
        %v833 = vsel %vm304, %v822, 0
        %835 = vmatprep.subr.mxu0 0.0
        %836 = vmatpush1.msra.mxu0 0.0
        %837 = vmatprep.subr.mxu0 0.0
        %838 = vmatpush1.msra.mxu0 0.0
        %839 = vmatprep.subr.mxu0 0.0
        %840 = vmatpush1.msra.mxu0 0.0
        %841 = vmatprep.subr.mxu0 0.0
        %842 = vmatpush1.msra.mxu0 0.0
        %843 = vmatprep.subr.mxu0 0.0
        %844 = vmatpush1.msra.mxu0 0.0
        %845 = vmatprep.subr.mxu0 0.0
        %846 = vmatpush1.msra.mxu0 0.0
        %847 = vmatprep.subr.mxu0 0.0
        %848 = vmatpush1.msra.mxu0 0.0
        %849 = vmatprep.subr.mxu0 0.0
        %850 = vmatpush1.msra.mxu0 0.0
        %851 = vmatprep.subr.mxu0 0.0
        %852 = vmatpush1.msra.mxu0 0.0
        %853 = vmatprep.subr.mxu0 0.0
        %854 = vmatpush1.msra.mxu0 0.0
        %855 = vmatprep.subr.mxu0 0.0
        %856 = vmatpush1.msra.mxu0 0.0
        %857 = vmatprep.subr.mxu0 0.0
        %858 = vmatpush1.msra.mxu0 0.0
        %859 = vmatprep.subr.mxu0 0.0
        %860 = vmatpush1.msra.mxu0 0.0
        %861 = vmatprep.subr.mxu0 0.0
        %862 = vmatpush1.msra.mxu0 0.0
        %863 = vmatprep.subr.mxu0 0.0
        %864 = vmatpush1.msra.mxu0 %v824
        %865 = vmatprep.subr.mxu0 0.0
        %866 = vmatpush1.msra.mxu0 %v823
        %867 = vmatprep.subr.mxu0 0.0
        %868 = vmatpush2.msra.mxu0 0.0
        %869 = vmatprep.subr.mxu0 0.0
        %870 = vmatpush2.msra.mxu0 0.0
        %871 = vmatprep.subr.mxu0 0.0
        %872 = vmatpush2.msra.mxu0 0.0
        %873 = vmatprep.subr.mxu0 0.0
        %874 = vmatpush2.msra.mxu0 0.0
        %875 = vmatprep.subr.mxu0 0.0
        %876 = vmatpush2.msra.mxu0 0.0
        %877 = vmatprep.subr.mxu0 0.0
        %878 = vmatpush2.msra.mxu0 0.0
        %879 = vmatprep.subr.mxu0 0.0
        %880 = vmatpush2.msra.mxu0 0.0
        %881 = vmatprep.subr.mxu0 0.0
        %882 = vmatpush2.msra.mxu0 0.0
        %883 = vmatprep.subr.mxu0 0.0
        %884 = vmatpush2.msra.mxu0 0.0
        %885 = vmatprep.subr.mxu0 0.0
        %886 = vmatpush2.msra.mxu0 0.0
        %887 = vmatprep.subr.mxu0 0.0
        %888 = vmatpush2.msra.mxu0 0.0
        %889 = vmatprep.subr.mxu0 0.0
        %890 = vmatpush2.msra.mxu0 0.0
        %891 = vmatprep.subr.mxu0 0.0
        %892 = vmatpush2.msra.mxu0 0.0
        %893 = vmatprep.subr.mxu0 0.0
        %894 = vmatpush2.msra.mxu0 0.0
        %895 = vmatprep.subr.mxu0 0.0
        %896 = vmatpush2.msra.mxu0 0.0
        %897 = vmatprep.subr.mxu0 0.0
        %898 = vmatpush2.msra.mxu0 0.0
        %899 = vmatprep.mubr.f32.mxu0 0.0
        %900 = vmatmul.mubr.f32.gmra.mxu0 %v833
        %v901 = vpop.f32.mrf.mxu0
        %v902 = vadd.f32 %v830, %v901
        %v903 = vpop.f32.mrf.mxu0
        %904 = vdwg.mxu0
        %v905 = vtanh.pop %v818
        %v906 = vld [vmem:[#allocation9] sm:$0xff]
        %v907 = vld [vmem:[#allocation9 + $0x8] sm:$0xff]
        %v908 = vld [vmem:[#allocation9 + $0x10] sm:$0xff]
        %v909 = vld [vmem:[#allocation9 + $0x18] sm:$0xff]
        %v910 = vld [vmem:[#allocation9 + $0x20] sm:$0xff]
        %v911 = vld [vmem:[#allocation9 + $0x28] sm:$0xff]
        %v912 = vld [vmem:[#allocation9 + $0x30] sm:$0xff]
        %v913 = vld [vmem:[#allocation9 + $0x38] sm:$0xff]
        %v914 = vld [vmem:[#allocation9 + $0x40] sm:$0xff]
        %v915 = vld [vmem:[#allocation9 + $0x48] sm:$0xff]
        %v916 = vld [vmem:[#allocation9 + $0x50] sm:$0xff]
        %v917 = vld [vmem:[#allocation9 + $0x58] sm:$0xff]
        %v918 = vld [vmem:[#allocation9 + $0x60] sm:$0xff]
        %v919 = vld [vmem:[#allocation9 + $0x68] sm:$0xff]
        %v920 = vld [vmem:[#allocation9 + $0x70] sm:$0xff]
        %v921 = vld [vmem:[#allocation9 + $0x78] sm:$0xff]
        %v922 = vmul.f32 %v818, 0.9
        %923 = vmatprep.subr.mxu0 0.0
        %924 = vmatpush1.msra.mxu0 %v921
        %925 = vmatprep.subr.mxu0 0.0
        %926 = vmatpush1.msra.mxu0 %v920
        %927 = vmatprep.subr.mxu0 0.0
        %928 = vmatpush1.msra.mxu0 %v919
        %929 = vmatprep.subr.mxu0 0.0
        %930 = vmatpush1.msra.mxu0 %v918
        %931 = vmatprep.subr.mxu0 0.0
        %932 = vmatpush1.msra.mxu0 %v917
        %933 = vmatprep.subr.mxu0 0.0
        %934 = vmatpush1.msra.mxu0 %v916
        %935 = vmatprep.subr.mxu0 0.0
        %936 = vmatpush1.msra.mxu0 %v915
        %937 = vmatprep.subr.mxu0 0.0
        %938 = vmatpush1.msra.mxu0 %v914
        %939 = vmatprep.subr.mxu0 0.0
        %940 = vmatpush1.msra.mxu0 %v913
        %941 = vmatprep.subr.mxu0 0.0
        %942 = vmatpush1.msra.mxu0 %v912
        %943 = vmatprep.subr.mxu0 0.0
        %944 = vmatpush1.msra.mxu0 %v911
        %945 = vmatprep.subr.mxu0 0.0
        %946 = vmatpush1.msra.mxu0 %v910
        %947 = vmatprep.subr.mxu0 0.0
        %948 = vmatpush1.msra.mxu0 %v909
        %949 = vmatprep.subr.mxu0 0.0
        %950 = vmatpush1.msra.mxu0 %v908
        %951 = vmatprep.subr.mxu0 0.0
        %952 = vmatpush1.msra.mxu0 %v907
        %953 = vmatprep.subr.mxu0 0.0
        %954 = vmatpush1.msra.mxu0 %v906
        %955 = vmatprep.subr.mxu0 0.0
        %956 = vmatpush2.msra.mxu0 0.0
        %957 = vmatprep.subr.mxu0 0.0
        %958 = vmatpush2.msra.mxu0 0.0
        %959 = vmatprep.subr.mxu0 0.0
        %960 = vmatpush2.msra.mxu0 0.0
        %961 = vmatprep.subr.mxu0 0.0
        %962 = vmatpush2.msra.mxu0 0.0
        %963 = vmatprep.subr.mxu0 0.0
        %964 = vmatpush2.msra.mxu0 0.0
        %965 = vmatprep.subr.mxu0 0.0
        %966 = vmatpush2.msra.mxu0 0.0
        %967 = vmatprep.subr.mxu0 0.0
        %968 = vmatpush2.msra.mxu0 0.0
        %969 = vmatprep.subr.mxu0 0.0
        %970 = vmatpush2.msra.mxu0 0.0
        %971 = vmatprep.subr.mxu0 0.0
        %972 = vmatpush2.msra.mxu0 0.0
        %973 = vmatprep.subr.mxu0 0.0
        %974 = vmatpush2.msra.mxu0 0.0
        %975 = vmatprep.subr.mxu0 0.0
        %976 = vmatpush2.msra.mxu0 0.0
        %977 = vmatprep.subr.mxu0 0.0
        %978 = vmatpush2.msra.mxu0 0.0
        %979 = vmatprep.subr.mxu0 0.0
        %980 = vmatpush2.msra.mxu0 0.0
        %981 = vmatprep.subr.mxu0 0.0
        %982 = vmatpush2.msra.mxu0 0.0
        %983 = vmatprep.subr.mxu0 0.0
        %984 = vmatpush2.msra.mxu0 0.0
        %985 = vmatprep.subr.mxu0 0.0
        %986 = vmatpush2.msra.mxu0 0.0
        %987 = vmatprep.mubr.f32.mxu0 0.0
        %988 = vmatmul.mubr.f32.gmra.mxu0 %v905
        %v989 = vpop.f32.mrf.mxu0
        %v990 = vadd.f32 %v902, %v989
        %v991 = vpop.f32.mrf.mxu0
        %992 = vdwg.mxu0
        %v993 = vmul.f32 %v990, 0.1
        %v994 = vadd.f32 %v922, %v993
        %s995 = scalar_lea.vmem %s284, 24 [#allocation11]
        %996 = vst [vmem:[%s995] sm:$0xff] %v994
        %997 = vst [vmem:[#allocation2] sm:$0xff] %v994
        %s998 = sand.u32 %s142, 1
        %s999 = scalar_lea.sflag [#allocation5], %s998
        %s1000 = sand.u32 %s142, 1
        %s1001 = smul.addr %s1000, 32
        %s1002 = scalar_lea.vmem [#allocation11], %s1001
        // Predicated region
        $region61: #{tpu_custom_call.1} parent=39 // pred_check
          %p1003 = pneg %p152
        $region62: #{tpu_custom_call.1} parent=39 // pred_check_branch
          %1005 = sbr.rel (%p1003) target = $region64
        $region63: #{tpu_custom_call.1} parent=39 // pred_region
          %s1006 = smul.u32 4, %s24
          %s1008 = ssub.s32 512, 512
          %1009 = vsyncadd %s999, %s1008
          %s1010 = smul.addr %s1006, 128
          %s1011 = scalar_lea.hbm %s5, %s1010
          %s1012 = sshll.u32 %s1002, 4
          %s1013 = int_to_ptr.vmem [resolvable:$true] %s1012
          %1018 = dma.vmem_to_hbm [thread:$0]  %s1013, 512, %s1011, %s999, 128, 128, 8
        $region64: #{tpu_custom_call.1} parent=39 // pred_fallthru
          _
      $region40: #{tpu_custom_call.1} parent=5 // pred_fallthru
        _
      %p1019 = scmp.le.s32.totalorder 2, %s19
      // Predicated region
      $region65: #{tpu_custom_call.1} parent=5 // pred_check
        %p1020 = pneg %p1019
      $region66: #{tpu_custom_call.1} parent=5 // pred_check_branch
        %1022 = sbr.rel (%p1020) target = $region68
      $region67: #{tpu_custom_call.1} parent=5 // pred_region
        %s1023 = ssub.s32 %s19, 2
        // Predicated region
        $region69: #{tpu_custom_call.1} parent=67 // pred_check
          %p1024 = pneg %p158
        $region70: #{tpu_custom_call.1} parent=67 // pred_check_branch
          %1026 = sbr.rel (%p1024) target = $region72
        $region71: #{tpu_custom_call.1} parent=67 // pred_region
          %s1027 = sand.u32 %s143, 1
          %s1028 = scalar_lea.sflag [#allocation5], %s1027
          %s1029 = sand.u32 %s143, 1
          %s1030 = smul.addr %s1029, 32
          %s1031 = scalar_lea.vmem [#allocation11], %s1030
          %1032 = dma.done %s1028, 512
        $region72: #{tpu_custom_call.1} parent=67 // pred_fallthru
          _
      $region68: #{tpu_custom_call.1} parent=5 // pred_fallthru
        _
    $region6: #{tpu_custom_call.1} parent=1 // loop_footer
      %s23 = sadd.s32 1, %s19
    $region7: #{tpu_custom_call.1} parent=1 // loop_footer_branch
      %18 = sbr.rel target = $region3
    $region8: #{tpu_custom_call.1} parent=1 // loop_exit
      _
    %1033 = vsyncpa [#allocation4], 1
    %s1034 = scalar_lea.sflag [#allocation4], 1
    %1035 = vsyncpa %s1034, 1
    %1036 = vsyncpa [#allocation7], 1
    %s1037 = scalar_lea.sflag [#allocation7], 1
    %1038 = vsyncpa %s1037, 1
    %1039 = vsyncpa [#allocation10], 1
    %1040 = vsyncpa [#allocation5], 1
    %s1041 = scalar_lea.sflag [#allocation5], 1
    %1042 = vsyncpa %s1041, 1

</llo_original>
